<compile_context>
chip_gen: v5e
topology: v5e:2x2
jax: 0.10.0
libtpu: 0.0.40
codegen_flags: <defaults>
</compile_context>

<pallas_src>
import jax
import jax.numpy as jnp
from jax.experimental import pallas as pl
from jax.experimental.pallas import tpu as pltpu

_LANE = 128
_TINY = 16384                              # below this, fused XLA sigmoid wins
_TARGET_BLOCK_BYTES = 4 * 1024 * 1024      # ~4 MiB blocks (~16 MiB resident)
_VMEM_LIMIT_BYTES = 48 * 1024 * 1024       # < v7x 64 MiB physical VMEM


def _sigmoid_kernel(x_ref, o_ref):
    # Load native dtype, compute in f32 (v5e has no bf16 VPU/EUP); one EUP
    # tanh instead of exp + divide:  sigmoid(x) = 0.5 * (tanh(x/2) + 1).
    x = x_ref[...].astype(jnp.float32)
    o_ref[...] = (0.5 * (jnp.tanh(0.5 * x) + 1.0)).astype(o_ref.dtype)


def _sublane_multiple(dtype) -> int:
    # Sub-32-bit dtypes pack along sublanes -> larger min second-to-last dim.
    itemsize = jnp.dtype(dtype).itemsize
    return {4: 8, 2: 16, 1: 32}.get(itemsize, 8)


def _choose_width(n: int):
    for w in (4096, 2048, 1024, 512, 256, 128):
        if n % w == 0:
            return w
    return None


def pallas_sigmoid(x: jax.Array) -> jax.Array:
    orig_shape = x.shape
    dtype = x.dtype
    n = x.size
    if n == 0:
        return x

    # Tiny tensors: a Pallas launch costs more than it saves.
    if n < _TINY:
        return jax.nn.sigmoid(x)

    flat = x.reshape(-1)

    # Lane-dense 2-D slab view.  If n isn't a multiple of 128, pad the flat
    # view once to a multiple of 1024 (= 8 * 128) and slice back afterwards.
    width = _choose_width(n)
    if width is None:
        n_eff = ((n + 1023) // 1024) * 1024
        flat = jnp.pad(flat, (0, n_eff - n))
        width = _choose_width(n_eff)
    else:
        n_eff = n

    rows = n_eff // width
    slab = flat.reshape(rows, width)

    sub = _sublane_multiple(dtype)
    bytes_per_row = width * jnp.dtype(dtype).itemsize

    # ~4 MiB blocks; double-buffered in+out stays well under the explicit
    # vmem limit on every generation.
    block_rows = max(sub, _TARGET_BLOCK_BYTES // bytes_per_row)
    # Guarantee several grid steps so DMA and compute overlap and the
    # "parallel" axis can shard across v7x's two TensorCores.
    if rows >= 4 * sub:
        block_rows = min(block_rows, max(sub, rows // 4))
    block_rows = max(sub, (block_rows // sub) * sub)   # dtype-aware min tile
    block_rows = min(block_rows, rows)                 # == rows -> full dim, OK

    grid = (pl.cdiv(rows, block_rows),)
    out = pl.pallas_call(
        _sigmoid_kernel,
        out_shape=jax.ShapeDtypeStruct((rows, width), dtype),
        grid_spec=pltpu.PrefetchScalarGridSpec(
            num_scalar_prefetch=0,
            grid=grid,
            in_specs=[pl.BlockSpec((block_rows, width), lambda i: (i, 0))],
            out_specs=pl.BlockSpec((block_rows, width), lambda i: (i, 0)),
        ),
        compiler_params=pltpu.CompilerParams(
            dimension_semantics=("parallel",),
            vmem_limit_bytes=_VMEM_LIMIT_BYTES,
        ),
    )(slab)

    out_flat = out.reshape(-1)
    if n_eff != n:
        out_flat = out_flat[:n]
    return out_flat.reshape(orig_shape)


class Nnmodule:
    """JAX/Pallas port of the PyTorch Nnmodule (forward = Sigmoid)."""

    def __init__(self):
        pass  # unused ReLU from the PyTorch __init__ intentionally omitted

    def __call__(self, x):
        return pallas_sigmoid(x)


if __name__ == "__main__":
    key = jax.random.PRNGKey(0)
    k0, k1, k2 = jax.random.split(key, 3)
    model = Nnmodule()

    # 1) Module-shaped input (torch.reshape(input, (-1, 1, 2, 2))): tiny,
    #    routed to the fused-XLA fallback.
    x_small = jax.random.normal(k0, (8, 1, 2, 2), dtype=jnp.float32)
    y_small = jax.block_until_ready(model(x_small))
    assert y_small.shape == x_small.shape and y_small.dtype == x_small.dtype
    assert jnp.allclose(y_small, jax.nn.sigmoid(x_small), atol=1e-5, rtol=1e-5)

    # 2) Lane-dense tiled Pallas path (262144 elems -> width 4096, rows 64,
    #    block_rows 16 -> 4-step parallel grid with full pipelining).
    x_big = jax.random.normal(k1, (256, 1, 32, 32), dtype=jnp.float32)
    y_big = jax.block_until_ready(model(x_big))
    assert y_big.shape == x_big.shape and y_big.dtype == x_big.dtype
    assert jnp.allclose(y_big, jax.nn.sigmoid(x_big), atol=1e-5, rtol=1e-5)

    # 3) Pallas path with an element count NOT divisible by 128 (padded slab,
    #    sliced back to the original shape).
    x_odd = jax.random.normal(k2, (17001,), dtype=jnp.float32)
    y_odd = jax.block_until_ready(model(x_odd))
    assert y_odd.shape == x_odd.shape and y_odd.dtype == x_odd.dtype
    assert jnp.allclose(y_odd, jax.nn.sigmoid(x_odd), atol=1e-5, rtol=1e-5)

    print("KERNEL_OK")
</pallas_src>

<mosaic_0001>
module attributes {stable_mosaic.version = 11 : i64} {
  func.func @_sigmoid_kernel(%arg0: i32, %arg1: memref<16x4096xf32, #tpu.memory_space<vmem>>, %arg2: memref<16x4096xf32, #tpu.memory_space<vmem>>) attributes {dimension_semantics = [#tpu.dimension_semantics<parallel>], iteration_bounds = array<i64: 4>, scalar_prefetch = 0 : i64, scratch_operands = 0 : i64, tpu.core_type = #tpu.core_type<tc>, window_params = [{transform_indices = @transform_0, window_bounds = array<i64: 16, 4096>}, {transform_indices = @transform_1, window_bounds = array<i64: 16, 4096>}]} {
    %c0 = arith.constant 0 : index
    %c0_0 = arith.constant 0 : index
    %0 = vector.load %arg1[%c0, %c0_0] : memref<16x4096xf32, #tpu.memory_space<vmem>>, vector<16x4096xf32>
    %cst = arith.constant 5.000000e-01 : f32
    %1 = vector.broadcast %cst : f32 to vector<16x4096xf32>
    %2 = arith.mulf %1, %0 : vector<16x4096xf32>
    %3 = math.tanh %2 : vector<16x4096xf32>
    %cst_1 = arith.constant 1.000000e+00 : f32
    %4 = vector.broadcast %cst_1 : f32 to vector<16x4096xf32>
    %5 = arith.addf %3, %4 : vector<16x4096xf32>
    %cst_2 = arith.constant 5.000000e-01 : f32
    %6 = vector.broadcast %cst_2 : f32 to vector<16x4096xf32>
    %7 = arith.mulf %6, %5 : vector<16x4096xf32>
    %c0_3 = arith.constant 0 : index
    %c0_4 = arith.constant 0 : index
    %8 = vector.load %arg2[%c0_3, %c0_4] : memref<16x4096xf32, #tpu.memory_space<vmem>>, vector<16x4096xf32>
    tpu.vector_store %arg2[%c0_3, %c0_4], %7 {strides = array<i32>} : memref<16x4096xf32, #tpu.memory_space<vmem>>, vector<16x4096xf32>,
    return
  }
  func.func @transform_0(%arg0: i32) -> (i32, i32) {
    %c0_i32 = arith.constant 0 : i32
    %c0_i32_0 = arith.constant 0 : i32
    return %arg0, %c0_i32 : i32, i32
  }
  func.func @transform_1(%arg0: i32) -> (i32, i32) {
    %c0_i32 = arith.constant 0 : i32
    %c0_i32_0 = arith.constant 0 : i32
    return %arg0, %c0_i32 : i32, i32
  }
}

</mosaic_0001>

<llo_original>
// kernel: tpu_custom_call.1
$region0: #{tpu_custom_call.1}
  #allocation0 [shape = 'u32[]', space=smem, size = 0x4, offset = 0x4, fixed_abs, tag = 'smem constant byte address 0x4 - core index']
  #allocation1 [shape = 'u32[72,128]{1,0:T(1,128)}', space=vmem, size = 0x9000, scoped, tag = 'internal scratch']
  %s0 = inlined_call_operand.hbm [shape: f32[64,4096], index: 0, kind: input, shape index: {}]
  %s1 = inlined_call_operand.hbm [shape: f32[64,4096], index: 1, kind: output, shape index: {}]
  %s2 = sld [smem:[#allocation0]]
  $region41: #{tpu_custom_call.1} parent=0
    _
  %s4 = ssub.s32 1, %s2
  %s5 = scalar_select 0, %s4, %s2
  $region1: #{tpu_custom_call.1} parent=0
    #allocation2 [shape = 'u8[524288]{0}', space=vmem, size = 0x80000, scoped, tag = 'input window, operand 0']
    #allocation3 [shape = 's32[2]{0}', space=sflag, size = 0x8, scoped, tag = 'scoped memory for tpu_custom_call.1']
    #allocation4 [shape = 's32[2]{0}', space=sflag, size = 0x8, scoped, tag = 'scoped memory for tpu_custom_call.1']
    #allocation5 [shape = 'u8[524288]{0}', space=vmem, size = 0x80000, scoped, tag = 'output window, operand 0']
    %6 = vsyncpa [#allocation3], 0
    %s7 = scalar_lea.sflag [#allocation3], 1
    %8 = vsyncpa %s7, 0
    %9 = vsyncpa [#allocation4], 0
    %s10 = scalar_lea.sflag [#allocation4], 1
    %11 = vsyncpa %s10, 0
    loop: start=0, step=1, limit=6
    $region2: #{tpu_custom_call.1} parent=1 // loop_pre_header
      _
    $region3: #{tpu_custom_call.1} parent=1 // loop_header
      %s13 = sphi 0, %s17
      %p14 = scmp.ge.s32.totalorder %s13, 6
      %s23 = sphi 0, %s25
      %s26 = sphi 0, %s23
      %s27 = sphi 0, %s26
      %s43 = sphi 0, %s27
      %s49 = sphi 0, %s51
      %s52 = sphi 0, %s49
      %s53 = sphi 0, %s52
      %s69 = sphi 0, %s53
    $region4: #{tpu_custom_call.1} parent=1 // loop_header_branch
      %16 = sbr.rel (%p14) target = $region8
    $region5: #{tpu_custom_call.1} parent=1 // loop_body
      %s18 = ssub.s32 %s13, 1
      %s19 = ssub.s32 %s13, 2
      %s20 = sadd.s32 %s13, 1
      %s21 = ssub.s32 %s13, %s20
      %p22 = scmp.eq.s32.totalorder %s21, 0
      %s24 = sadd.s32 %s23, 1
      %s25 = scalar_select %p22, %s23, %s24
      %p28 = pneg %p22
      %p29 = scmp.eq.s32.totalorder %s13, 3
      %p30 = por %p28, %p29
      %p31 = scmp.ne.s32.totalorder %s23, %s26
      %p32 = scmp.eq.s32.totalorder %s13, 0
      %p33 = por %p31, %p32
      %p34 = scmp.ne.s32.totalorder %s23, %s26
      %p35 = scmp.eq.s32.totalorder %s18, 3
      %p36 = por %p34, %p35
      %p37 = scmp.ne.s32.totalorder %s26, %s27
      %p38 = scmp.eq.s32.totalorder %s18, 0
      %p39 = por %p37, %p38
      %p40 = scmp.ne.s32.totalorder %s26, %s27
      %p41 = scmp.eq.s32.totalorder %s19, 3
      %p42 = por %p40, %p41
      %p44 = scmp.ne.s32.totalorder %s27, %s43
      %p45 = scmp.eq.s32.totalorder %s19, 0
      %p46 = por %p44, %p45
      %s47 = ssub.s32 %s13, %s20
      %p48 = scmp.eq.s32.totalorder %s47, 0
      %s50 = sadd.s32 %s49, 1
      %s51 = scalar_select %p48, %s49, %s50
      %p54 = pneg %p48
      %p55 = scmp.eq.s32.totalorder %s13, 3
      %p56 = por %p54, %p55
      %p57 = scmp.ne.s32.totalorder %s49, %s52
      %p58 = scmp.eq.s32.totalorder %s13, 0
      %p59 = por %p57, %p58
      %p60 = scmp.ne.s32.totalorder %s49, %s52
      %p61 = scmp.eq.s32.totalorder %s18, 3
      %p62 = por %p60, %p61
      %p63 = scmp.ne.s32.totalorder %s52, %s53
      %p64 = scmp.eq.s32.totalorder %s18, 0
      %p65 = por %p63, %p64
      %p66 = scmp.ne.s32.totalorder %s52, %s53
      %p67 = scmp.eq.s32.totalorder %s19, 3
      %p68 = por %p66, %p67
      %p70 = scmp.ne.s32.totalorder %s53, %s69
      %p71 = scmp.eq.s32.totalorder %s19, 0
      %p72 = por %p70, %p71
      %p73 = scmp.le.s32.totalorder 1, %s13
      %p74 = scmp.lt.s32.totalorder %s13, 5
      %p75 = pnand %p73, %p74
      %p76 = pneg %p75
      // Predicated region
      $region9: #{tpu_custom_call.1} parent=5 // pred_check
        _
      $region10: #{tpu_custom_call.1} parent=5 // pred_check_branch
        %78 = sbr.rel (%p75) target = $region12
      $region11: #{tpu_custom_call.1} parent=5 // pred_region
        %s79 = ssub.s32 %s13, 1
      $region12: #{tpu_custom_call.1} parent=5 // pred_fallthru
        _
      %p80 = scmp.lt.s32.totalorder %s13, 4
      // Predicated region
      $region13: #{tpu_custom_call.1} parent=5 // pred_check
        %p81 = pneg %p80
      $region14: #{tpu_custom_call.1} parent=5 // pred_check_branch
        %83 = sbr.rel (%p81) target = $region16
      $region15: #{tpu_custom_call.1} parent=5 // pred_region
        // Predicated region
        $region17: #{tpu_custom_call.1} parent=15 // pred_check
          %p84 = pneg %p33
        $region18: #{tpu_custom_call.1} parent=15 // pred_check_branch
          %86 = sbr.rel (%p84) target = $region20
        $region19: #{tpu_custom_call.1} parent=15 // pred_region
          %s87 = sand.u32 %s23, 1
          %s88 = scalar_lea.sflag [#allocation3], %s87
          %s89 = sand.u32 %s23, 1
          %s90 = smul.addr %s89, 512
          %s91 = scalar_lea.vmem [#allocation2], %s90
          %s92 = smul.u32 2, %s13
          %94 = vsyncadd %s88, 0
          %s95 = smul.addr %s92, 32
          %s96 = smul.addr %s95, 8
          %s97 = scalar_lea.hbm %s0, %s96
          %s98 = sshll.u32 %s97, 4
          %s99 = int_to_ptr.hbm [resolvable:$true] %s98
          %s100 = sshll.u32 %s91, 4
          %s101 = int_to_ptr.vmem [resolvable:$true] %s100
          %106 = dma.hbm_to_vmem [thread:$0]  %s99, 8192, %s101, %s88, 4096, 4096, 256
        $region20: #{tpu_custom_call.1} parent=15 // pred_fallthru
          _
      $region16: #{tpu_custom_call.1} parent=5 // pred_fallthru
        _
      %p107 = scmp.le.s32.totalorder 1, %s13
      %p108 = scmp.lt.s32.totalorder %s13, 5
      %p109 = pnand %p107, %p108
      %p110 = pneg %p109
      // Predicated region
      $region21: #{tpu_custom_call.1} parent=5 // pred_check
        _
      $region22: #{tpu_custom_call.1} parent=5 // pred_check_branch
        %112 = sbr.rel (%p109) target = $region24
      $region23: #{tpu_custom_call.1} parent=5 // pred_region
        %s113 = ssub.s32 %s13, 1
        %s114 = sand.u32 %s26, 1
        %s115 = scalar_lea.sflag [#allocation3], %s114
        %s116 = sand.u32 %s26, 1
        %s117 = smul.addr %s116, 512
        %s118 = scalar_lea.vmem [#allocation2], %s117
        // Predicated region
        $region25: #{tpu_custom_call.1} parent=23 // pred_check
          %p119 = pneg %p39
        $region26: #{tpu_custom_call.1} parent=23 // pred_check_branch
          %121 = sbr.rel (%p119) target = $region28
        $region27: #{tpu_custom_call.1} parent=23 // pred_region
          %123 = dma.done %s115, 8192
        $region28: #{tpu_custom_call.1} parent=23 // pred_fallthru
          _
        %s124 = sand.u32 %s26, 1
        %s125 = scalar_lea.sflag [#allocation3], %s124
        %s126 = sand.u32 %s26, 1
        %s127 = smul.addr %s126, 512
        %s128 = scalar_lea.vmem [#allocation2], %s127
        %p129 = pneg %p39
        %p130 = pneg %p36
        %p131 = pneg %p65
        %p132 = pneg %p62
        %s133 = sand.u32 %s52, 1
        %s134 = scalar_lea.sflag [#allocation4], %s133
        %s135 = sand.u32 %s52, 1
        %s136 = smul.addr %s135, 512
        %s137 = scalar_lea.vmem [#allocation5], %s136
        %s138 = smul.u32 2, %s18
        %s139 = smul.u32 2, %s18
        %v140 = vld [vmem:[%s118] sm:$0xff]
        %v141 = vld [vmem:[%s118 + $0x8] sm:$0xff]
        %v142 = vld [vmem:[%s118 + $0x10] sm:$0xff]
        %v143 = vld [vmem:[%s118 + $0x18] sm:$0xff]
        %v144 = vld [vmem:[%s118 + $0x20] sm:$0xff]
        %v145 = vld [vmem:[%s118 + $0x28] sm:$0xff]
        %v146 = vld [vmem:[%s118 + $0x30] sm:$0xff]
        %v147 = vld [vmem:[%s118 + $0x38] sm:$0xff]
        %v148 = vld [vmem:[%s118 + $0x40] sm:$0xff]
        %v149 = vld [vmem:[%s118 + $0x48] sm:$0xff]
        %v150 = vld [vmem:[%s118 + $0x50] sm:$0xff]
        %v151 = vld [vmem:[%s118 + $0x58] sm:$0xff]
        %v152 = vld [vmem:[%s118 + $0x60] sm:$0xff]
        %v153 = vld [vmem:[%s118 + $0x68] sm:$0xff]
        %v154 = vld [vmem:[%s118 + $0x70] sm:$0xff]
        %v155 = vld [vmem:[%s118 + $0x78] sm:$0xff]
        %v156 = vld [vmem:[%s118 + $0x80] sm:$0xff]
        %v157 = vld [vmem:[%s118 + $0x88] sm:$0xff]
        %v158 = vld [vmem:[%s118 + $0x90] sm:$0xff]
        %v159 = vld [vmem:[%s118 + $0x98] sm:$0xff]
        %v160 = vld [vmem:[%s118 + $0xa0] sm:$0xff]
        %v161 = vld [vmem:[%s118 + $0xa8] sm:$0xff]
        %v162 = vld [vmem:[%s118 + $0xb0] sm:$0xff]
        %v163 = vld [vmem:[%s118 + $0xb8] sm:$0xff]
        %v164 = vld [vmem:[%s118 + $0xc0] sm:$0xff]
        %v165 = vld [vmem:[%s118 + $0xc8] sm:$0xff]
        %v166 = vld [vmem:[%s118 + $0xd0] sm:$0xff]
        %v167 = vld [vmem:[%s118 + $0xd8] sm:$0xff]
        %v168 = vld [vmem:[%s118 + $0xe0] sm:$0xff]
        %v169 = vld [vmem:[%s118 + $0xe8] sm:$0xff]
        %v170 = vld [vmem:[%s118 + $0xf0] sm:$0xff]
        %v171 = vld [vmem:[%s118 + $0xf8] sm:$0xff]
        %v172 = vld [vmem:[%s118 + $0x100] sm:$0xff]
        %v173 = vld [vmem:[%s118 + $0x108] sm:$0xff]
        %v174 = vld [vmem:[%s118 + $0x110] sm:$0xff]
        %v175 = vld [vmem:[%s118 + $0x118] sm:$0xff]
        %v176 = vld [vmem:[%s118 + $0x120] sm:$0xff]
        %v177 = vld [vmem:[%s118 + $0x128] sm:$0xff]
        %v178 = vld [vmem:[%s118 + $0x130] sm:$0xff]
        %v179 = vld [vmem:[%s118 + $0x138] sm:$0xff]
        %v180 = vld [vmem:[%s118 + $0x140] sm:$0xff]
        %v181 = vld [vmem:[%s118 + $0x148] sm:$0xff]
        %v182 = vld [vmem:[%s118 + $0x150] sm:$0xff]
        %v183 = vld [vmem:[%s118 + $0x158] sm:$0xff]
        %v184 = vld [vmem:[%s118 + $0x160] sm:$0xff]
        %v185 = vld [vmem:[%s118 + $0x168] sm:$0xff]
        %v186 = vld [vmem:[%s118 + $0x170] sm:$0xff]
        %v187 = vld [vmem:[%s118 + $0x178] sm:$0xff]
        %v188 = vld [vmem:[%s118 + $0x180] sm:$0xff]
        %v189 = vld [vmem:[%s118 + $0x188] sm:$0xff]
        %v190 = vld [vmem:[%s118 + $0x190] sm:$0xff]
        %v191 = vld [vmem:[%s118 + $0x198] sm:$0xff]
        %v192 = vld [vmem:[%s118 + $0x1a0] sm:$0xff]
        %v193 = vld [vmem:[%s118 + $0x1a8] sm:$0xff]
        %v194 = vld [vmem:[%s118 + $0x1b0] sm:$0xff]
        %v195 = vld [vmem:[%s118 + $0x1b8] sm:$0xff]
        %v196 = vld [vmem:[%s118 + $0x1c0] sm:$0xff]
        %v197 = vld [vmem:[%s118 + $0x1c8] sm:$0xff]
        %v198 = vld [vmem:[%s118 + $0x1d0] sm:$0xff]
        %v199 = vld [vmem:[%s118 + $0x1d8] sm:$0xff]
        %v200 = vld [vmem:[%s118 + $0x1e0] sm:$0xff]
        %v201 = vld [vmem:[%s118 + $0x1e8] sm:$0xff]
        %v202 = vld [vmem:[%s118 + $0x1f0] sm:$0xff]
        %v203 = vld [vmem:[%s118 + $0x1f8] sm:$0xff]
        %v204 = vmul.f32 %v140, 0.5
        %v205 = vmul.f32 %v141, 0.5
        %v206 = vmul.f32 %v142, 0.5
        %v207 = vmul.f32 %v143, 0.5
        %v208 = vmul.f32 %v144, 0.5
        %v209 = vmul.f32 %v145, 0.5
        %v210 = vmul.f32 %v146, 0.5
        %v211 = vmul.f32 %v147, 0.5
        %v212 = vmul.f32 %v148, 0.5
        %v213 = vmul.f32 %v149, 0.5
        %v214 = vmul.f32 %v150, 0.5
        %v215 = vmul.f32 %v151, 0.5
        %v216 = vmul.f32 %v152, 0.5
        %v217 = vmul.f32 %v153, 0.5
        %v218 = vmul.f32 %v154, 0.5
        %v219 = vmul.f32 %v155, 0.5
        %v220 = vmul.f32 %v156, 0.5
        %v221 = vmul.f32 %v157, 0.5
        %v222 = vmul.f32 %v158, 0.5
        %v223 = vmul.f32 %v159, 0.5
        %v224 = vmul.f32 %v160, 0.5
        %v225 = vmul.f32 %v161, 0.5
        %v226 = vmul.f32 %v162, 0.5
        %v227 = vmul.f32 %v163, 0.5
        %v228 = vmul.f32 %v164, 0.5
        %v229 = vmul.f32 %v165, 0.5
        %v230 = vmul.f32 %v166, 0.5
        %v231 = vmul.f32 %v167, 0.5
        %v232 = vmul.f32 %v168, 0.5
        %v233 = vmul.f32 %v169, 0.5
        %v234 = vmul.f32 %v170, 0.5
        %v235 = vmul.f32 %v171, 0.5
        %v236 = vmul.f32 %v172, 0.5
        %v237 = vmul.f32 %v173, 0.5
        %v238 = vmul.f32 %v174, 0.5
        %v239 = vmul.f32 %v175, 0.5
        %v240 = vmul.f32 %v176, 0.5
        %v241 = vmul.f32 %v177, 0.5
        %v242 = vmul.f32 %v178, 0.5
        %v243 = vmul.f32 %v179, 0.5
        %v244 = vmul.f32 %v180, 0.5
        %v245 = vmul.f32 %v181, 0.5
        %v246 = vmul.f32 %v182, 0.5
        %v247 = vmul.f32 %v183, 0.5
        %v248 = vmul.f32 %v184, 0.5
        %v249 = vmul.f32 %v185, 0.5
        %v250 = vmul.f32 %v186, 0.5
        %v251 = vmul.f32 %v187, 0.5
        %v252 = vmul.f32 %v188, 0.5
        %v253 = vmul.f32 %v189, 0.5
        %v254 = vmul.f32 %v190, 0.5
        %v255 = vmul.f32 %v191, 0.5
        %v256 = vmul.f32 %v192, 0.5
        %v257 = vmul.f32 %v193, 0.5
        %v258 = vmul.f32 %v194, 0.5
        %v259 = vmul.f32 %v195, 0.5
        %v260 = vmul.f32 %v196, 0.5
        %v261 = vmul.f32 %v197, 0.5
        %v262 = vmul.f32 %v198, 0.5
        %v263 = vmul.f32 %v199, 0.5
        %v264 = vmul.f32 %v200, 0.5
        %v265 = vmul.f32 %v201, 0.5
        %v266 = vmul.f32 %v202, 0.5
        %v267 = vmul.f32 %v203, 0.5
        %v268 = vtanh.pop %v204
        %v269 = vtanh.pop %v205
        %v270 = vtanh.pop %v206
        %v271 = vtanh.pop %v207
        %v272 = vtanh.pop %v208
        %v273 = vtanh.pop %v209
        %v274 = vtanh.pop %v210
        %v275 = vtanh.pop %v211
        %v276 = vtanh.pop %v212
        %v277 = vtanh.pop %v213
        %v278 = vtanh.pop %v214
        %v279 = vtanh.pop %v215
        %v280 = vtanh.pop %v216
        %v281 = vtanh.pop %v217
        %v282 = vtanh.pop %v218
        %v283 = vtanh.pop %v219
        %v284 = vtanh.pop %v220
        %v285 = vtanh.pop %v221
        %v286 = vtanh.pop %v222
        %v287 = vtanh.pop %v223
        %v288 = vtanh.pop %v224
        %v289 = vtanh.pop %v225
        %v290 = vtanh.pop %v226
        %v291 = vtanh.pop %v227
        %v292 = vtanh.pop %v228
        %v293 = vtanh.pop %v229
        %v294 = vtanh.pop %v230
        %v295 = vtanh.pop %v231
        %v296 = vtanh.pop %v232
        %v297 = vtanh.pop %v233
        %v298 = vtanh.pop %v234
        %v299 = vtanh.pop %v235
        %v300 = vtanh.pop %v236
        %v301 = vtanh.pop %v237
        %v302 = vtanh.pop %v238
        %v303 = vtanh.pop %v239
        %v304 = vtanh.pop %v240
        %v305 = vtanh.pop %v241
        %v306 = vtanh.pop %v242
        %v307 = vtanh.pop %v243
        %v308 = vtanh.pop %v244
        %v309 = vtanh.pop %v245
        %v310 = vtanh.pop %v246
        %v311 = vtanh.pop %v247
        %v312 = vtanh.pop %v248
        %v313 = vtanh.pop %v249
        %v314 = vtanh.pop %v250
        %v315 = vtanh.pop %v251
        %v316 = vtanh.pop %v252
        %v317 = vtanh.pop %v253
        %v318 = vtanh.pop %v254
        %v319 = vtanh.pop %v255
        %v320 = vtanh.pop %v256
        %v321 = vtanh.pop %v257
        %v322 = vtanh.pop %v258
        %v323 = vtanh.pop %v259
        %v324 = vtanh.pop %v260
        %v325 = vtanh.pop %v261
        %v326 = vtanh.pop %v262
        %v327 = vtanh.pop %v263
        %v328 = vtanh.pop %v264
        %v329 = vtanh.pop %v265
        %v330 = vtanh.pop %v266
        %v331 = vtanh.pop %v267
        %v332 = vadd.f32 %v268, 1.0
        %v333 = vadd.f32 %v269, 1.0
        %v334 = vadd.f32 %v270, 1.0
        %v335 = vadd.f32 %v271, 1.0
        %v336 = vadd.f32 %v272, 1.0
        %v337 = vadd.f32 %v273, 1.0
        %v338 = vadd.f32 %v274, 1.0
        %v339 = vadd.f32 %v275, 1.0
        %v340 = vadd.f32 %v276, 1.0
        %v341 = vadd.f32 %v277, 1.0
        %v342 = vadd.f32 %v278, 1.0
        %v343 = vadd.f32 %v279, 1.0
        %v344 = vadd.f32 %v280, 1.0
        %v345 = vadd.f32 %v281, 1.0
        %v346 = vadd.f32 %v282, 1.0
        %v347 = vadd.f32 %v283, 1.0
        %v348 = vadd.f32 %v284, 1.0
        %v349 = vadd.f32 %v285, 1.0
        %v350 = vadd.f32 %v286, 1.0
        %v351 = vadd.f32 %v287, 1.0
        %v352 = vadd.f32 %v288, 1.0
        %v353 = vadd.f32 %v289, 1.0
        %v354 = vadd.f32 %v290, 1.0
        %v355 = vadd.f32 %v291, 1.0
        %v356 = vadd.f32 %v292, 1.0
        %v357 = vadd.f32 %v293, 1.0
        %v358 = vadd.f32 %v294, 1.0
        %v359 = vadd.f32 %v295, 1.0
        %v360 = vadd.f32 %v296, 1.0
        %v361 = vadd.f32 %v297, 1.0
        %v362 = vadd.f32 %v298, 1.0
        %v363 = vadd.f32 %v299, 1.0
        %v364 = vadd.f32 %v300, 1.0
        %v365 = vadd.f32 %v301, 1.0
        %v366 = vadd.f32 %v302, 1.0
        %v367 = vadd.f32 %v303, 1.0
        %v368 = vadd.f32 %v304, 1.0
        %v369 = vadd.f32 %v305, 1.0
        %v370 = vadd.f32 %v306, 1.0
        %v371 = vadd.f32 %v307, 1.0
        %v372 = vadd.f32 %v308, 1.0
        %v373 = vadd.f32 %v309, 1.0
        %v374 = vadd.f32 %v310, 1.0
        %v375 = vadd.f32 %v311, 1.0
        %v376 = vadd.f32 %v312, 1.0
        %v377 = vadd.f32 %v313, 1.0
        %v378 = vadd.f32 %v314, 1.0
        %v379 = vadd.f32 %v315, 1.0
        %v380 = vadd.f32 %v316, 1.0
        %v381 = vadd.f32 %v317, 1.0
        %v382 = vadd.f32 %v318, 1.0
        %v383 = vadd.f32 %v319, 1.0
        %v384 = vadd.f32 %v320, 1.0
        %v385 = vadd.f32 %v321, 1.0
        %v386 = vadd.f32 %v322, 1.0
        %v387 = vadd.f32 %v323, 1.0
        %v388 = vadd.f32 %v324, 1.0
        %v389 = vadd.f32 %v325, 1.0
        %v390 = vadd.f32 %v326, 1.0
        %v391 = vadd.f32 %v327, 1.0
        %v392 = vadd.f32 %v328, 1.0
        %v393 = vadd.f32 %v329, 1.0
        %v394 = vadd.f32 %v330, 1.0
        %v395 = vadd.f32 %v331, 1.0
        %v396 = vmul.f32 %v332, 0.5
        %v397 = vmul.f32 %v333, 0.5
        %v398 = vmul.f32 %v334, 0.5
        %v399 = vmul.f32 %v335, 0.5
        %v400 = vmul.f32 %v336, 0.5
        %v401 = vmul.f32 %v337, 0.5
        %v402 = vmul.f32 %v338, 0.5
        %v403 = vmul.f32 %v339, 0.5
        %v404 = vmul.f32 %v340, 0.5
        %v405 = vmul.f32 %v341, 0.5
        %v406 = vmul.f32 %v342, 0.5
        %v407 = vmul.f32 %v343, 0.5
        %v408 = vmul.f32 %v344, 0.5
        %v409 = vmul.f32 %v345, 0.5
        %v410 = vmul.f32 %v346, 0.5
        %v411 = vmul.f32 %v347, 0.5
        %v412 = vmul.f32 %v348, 0.5
        %v413 = vmul.f32 %v349, 0.5
        %v414 = vmul.f32 %v350, 0.5
        %v415 = vmul.f32 %v351, 0.5
        %v416 = vmul.f32 %v352, 0.5
        %v417 = vmul.f32 %v353, 0.5
        %v418 = vmul.f32 %v354, 0.5
        %v419 = vmul.f32 %v355, 0.5
        %v420 = vmul.f32 %v356, 0.5
        %v421 = vmul.f32 %v357, 0.5
        %v422 = vmul.f32 %v358, 0.5
        %v423 = vmul.f32 %v359, 0.5
        %v424 = vmul.f32 %v360, 0.5
        %v425 = vmul.f32 %v361, 0.5
        %v426 = vmul.f32 %v362, 0.5
        %v427 = vmul.f32 %v363, 0.5
        %v428 = vmul.f32 %v364, 0.5
        %v429 = vmul.f32 %v365, 0.5
        %v430 = vmul.f32 %v366, 0.5
        %v431 = vmul.f32 %v367, 0.5
        %v432 = vmul.f32 %v368, 0.5
        %v433 = vmul.f32 %v369, 0.5
        %v434 = vmul.f32 %v370, 0.5
        %v435 = vmul.f32 %v371, 0.5
        %v436 = vmul.f32 %v372, 0.5
        %v437 = vmul.f32 %v373, 0.5
        %v438 = vmul.f32 %v374, 0.5
        %v439 = vmul.f32 %v375, 0.5
        %v440 = vmul.f32 %v376, 0.5
        %v441 = vmul.f32 %v377, 0.5
        %v442 = vmul.f32 %v378, 0.5
        %v443 = vmul.f32 %v379, 0.5
        %v444 = vmul.f32 %v380, 0.5
        %v445 = vmul.f32 %v381, 0.5
        %v446 = vmul.f32 %v382, 0.5
        %v447 = vmul.f32 %v383, 0.5
        %v448 = vmul.f32 %v384, 0.5
        %v449 = vmul.f32 %v385, 0.5
        %v450 = vmul.f32 %v386, 0.5
        %v451 = vmul.f32 %v387, 0.5
        %v452 = vmul.f32 %v388, 0.5
        %v453 = vmul.f32 %v389, 0.5
        %v454 = vmul.f32 %v390, 0.5
        %v455 = vmul.f32 %v391, 0.5
        %v456 = vmul.f32 %v392, 0.5
        %v457 = vmul.f32 %v393, 0.5
        %v458 = vmul.f32 %v394, 0.5
        %v459 = vmul.f32 %v395, 0.5
        %460 = vst [vmem:[%s137] sm:$0xff] %v396
        %461 = vst [vmem:[%s137 + $0x8] sm:$0xff] %v397
        %462 = vst [vmem:[%s137 + $0x10] sm:$0xff] %v398
        %463 = vst [vmem:[%s137 + $0x18] sm:$0xff] %v399
        %464 = vst [vmem:[%s137 + $0x20] sm:$0xff] %v400
        %465 = vst [vmem:[%s137 + $0x28] sm:$0xff] %v401
        %466 = vst [vmem:[%s137 + $0x30] sm:$0xff] %v402
        %467 = vst [vmem:[%s137 + $0x38] sm:$0xff] %v403
        %468 = vst [vmem:[%s137 + $0x40] sm:$0xff] %v404
        %469 = vst [vmem:[%s137 + $0x48] sm:$0xff] %v405
        %470 = vst [vmem:[%s137 + $0x50] sm:$0xff] %v406
        %471 = vst [vmem:[%s137 + $0x58] sm:$0xff] %v407
        %472 = vst [vmem:[%s137 + $0x60] sm:$0xff] %v408
        %473 = vst [vmem:[%s137 + $0x68] sm:$0xff] %v409
        %474 = vst [vmem:[%s137 + $0x70] sm:$0xff] %v410
        %475 = vst [vmem:[%s137 + $0x78] sm:$0xff] %v411
        %476 = vst [vmem:[%s137 + $0x80] sm:$0xff] %v412
        %477 = vst [vmem:[%s137 + $0x88] sm:$0xff] %v413
        %478 = vst [vmem:[%s137 + $0x90] sm:$0xff] %v414
        %479 = vst [vmem:[%s137 + $0x98] sm:$0xff] %v415
        %480 = vst [vmem:[%s137 + $0xa0] sm:$0xff] %v416
        %481 = vst [vmem:[%s137 + $0xa8] sm:$0xff] %v417
        %482 = vst [vmem:[%s137 + $0xb0] sm:$0xff] %v418
        %483 = vst [vmem:[%s137 + $0xb8] sm:$0xff] %v419
        %484 = vst [vmem:[%s137 + $0xc0] sm:$0xff] %v420
        %485 = vst [vmem:[%s137 + $0xc8] sm:$0xff] %v421
        %486 = vst [vmem:[%s137 + $0xd0] sm:$0xff] %v422
        %487 = vst [vmem:[%s137 + $0xd8] sm:$0xff] %v423
        %488 = vst [vmem:[%s137 + $0xe0] sm:$0xff] %v424
        %489 = vst [vmem:[%s137 + $0xe8] sm:$0xff] %v425
        %490 = vst [vmem:[%s137 + $0xf0] sm:$0xff] %v426
        %491 = vst [vmem:[%s137 + $0xf8] sm:$0xff] %v427
        %492 = vst [vmem:[%s137 + $0x100] sm:$0xff] %v428
        %493 = vst [vmem:[%s137 + $0x108] sm:$0xff] %v429
        %494 = vst [vmem:[%s137 + $0x110] sm:$0xff] %v430
        %495 = vst [vmem:[%s137 + $0x118] sm:$0xff] %v431
        %496 = vst [vmem:[%s137 + $0x120] sm:$0xff] %v432
        %497 = vst [vmem:[%s137 + $0x128] sm:$0xff] %v433
        %498 = vst [vmem:[%s137 + $0x130] sm:$0xff] %v434
        %499 = vst [vmem:[%s137 + $0x138] sm:$0xff] %v435
        %500 = vst [vmem:[%s137 + $0x140] sm:$0xff] %v436
        %501 = vst [vmem:[%s137 + $0x148] sm:$0xff] %v437
        %502 = vst [vmem:[%s137 + $0x150] sm:$0xff] %v438
        %503 = vst [vmem:[%s137 + $0x158] sm:$0xff] %v439
        %504 = vst [vmem:[%s137 + $0x160] sm:$0xff] %v440
        %505 = vst [vmem:[%s137 + $0x168] sm:$0xff] %v441
        %506 = vst [vmem:[%s137 + $0x170] sm:$0xff] %v442
        %507 = vst [vmem:[%s137 + $0x178] sm:$0xff] %v443
        %508 = vst [vmem:[%s137 + $0x180] sm:$0xff] %v444
        %509 = vst [vmem:[%s137 + $0x188] sm:$0xff] %v445
        %510 = vst [vmem:[%s137 + $0x190] sm:$0xff] %v446
        %511 = vst [vmem:[%s137 + $0x198] sm:$0xff] %v447
        %512 = vst [vmem:[%s137 + $0x1a0] sm:$0xff] %v448
        %513 = vst [vmem:[%s137 + $0x1a8] sm:$0xff] %v449
        %514 = vst [vmem:[%s137 + $0x1b0] sm:$0xff] %v450
        %515 = vst [vmem:[%s137 + $0x1b8] sm:$0xff] %v451
        %516 = vst [vmem:[%s137 + $0x1c0] sm:$0xff] %v452
        %517 = vst [vmem:[%s137 + $0x1c8] sm:$0xff] %v453
        %518 = vst [vmem:[%s137 + $0x1d0] sm:$0xff] %v454
        %519 = vst [vmem:[%s137 + $0x1d8] sm:$0xff] %v455
        %520 = vst [vmem:[%s137 + $0x1e0] sm:$0xff] %v456
        %521 = vst [vmem:[%s137 + $0x1e8] sm:$0xff] %v457
        %522 = vst [vmem:[%s137 + $0x1f0] sm:$0xff] %v458
        %523 = vst [vmem:[%s137 + $0x1f8] sm:$0xff] %v459
        %s524 = sand.u32 %s52, 1
        %s525 = scalar_lea.sflag [#allocation4], %s524
        %s526 = sand.u32 %s52, 1
        %s527 = smul.addr %s526, 512
        %s528 = scalar_lea.vmem [#allocation5], %s527
        // Predicated region
        $region29: #{tpu_custom_call.1} parent=23 // pred_check
          %p529 = pneg %p62
        $region30: #{tpu_custom_call.1} parent=23 // pred_check_branch
          %531 = sbr.rel (%p529) target = $region32
        $region31: #{tpu_custom_call.1} parent=23 // pred_region
          %s532 = smul.u32 2, %s18
          %534 = vsyncadd %s525, 0
          %s535 = smul.addr %s532, 32
          %s536 = smul.addr %s535, 8
          %s537 = scalar_lea.hbm %s1, %s536
          %s538 = sshll.u32 %s528, 4
          %s539 = int_to_ptr.vmem [resolvable:$true] %s538
          %s540 = sshll.u32 %s537, 4
          %s541 = int_to_ptr.hbm [resolvable:$true] %s540
          %546 = dma.vmem_to_hbm [thread:$0]  %s539, 8192, %s541, %s525, 4096, 4096, 256
        $region32: #{tpu_custom_call.1} parent=23 // pred_fallthru
          _
      $region24: #{tpu_custom_call.1} parent=5 // pred_fallthru
        _
      %p547 = scmp.le.s32.totalorder 2, %s13
      // Predicated region
      $region33: #{tpu_custom_call.1} parent=5 // pred_check
        %p548 = pneg %p547
      $region34: #{tpu_custom_call.1} parent=5 // pred_check_branch
        %550 = sbr.rel (%p548) target = $region36
      $region35: #{tpu_custom_call.1} parent=5 // pred_region
        %s551 = ssub.s32 %s13, 2
        // Predicated region
        $region37: #{tpu_custom_call.1} parent=35 // pred_check
          %p552 = pneg %p68
        $region38: #{tpu_custom_call.1} parent=35 // pred_check_branch
          %554 = sbr.rel (%p552) target = $region40
        $region39: #{tpu_custom_call.1} parent=35 // pred_region
          %s555 = sand.u32 %s53, 1
          %s556 = scalar_lea.sflag [#allocation4], %s555
          %s557 = sand.u32 %s53, 1
          %s558 = smul.addr %s557, 512
          %s559 = scalar_lea.vmem [#allocation5], %s558
          %561 = dma.done %s556, 8192
        $region40: #{tpu_custom_call.1} parent=35 // pred_fallthru
          _
      $region36: #{tpu_custom_call.1} parent=5 // pred_fallthru
        _
    $region6: #{tpu_custom_call.1} parent=1 // loop_footer
      %s17 = sadd.s32 1, %s13
    $region7: #{tpu_custom_call.1} parent=1 // loop_footer_branch
      %12 = sbr.rel target = $region3
    $region8: #{tpu_custom_call.1} parent=1 // loop_exit
      _
    %562 = vsyncpa [#allocation3], 1
    %s563 = scalar_lea.sflag [#allocation3], 1
    %564 = vsyncpa %s563, 1
    %565 = vsyncpa [#allocation4], 1
    %s566 = scalar_lea.sflag [#allocation4], 1
    %567 = vsyncpa %s566, 1

</llo_original>
